<compile_context>
chip_gen: v7x
topology: tpu7x:2x2x1
jax: 0.10.0
libtpu: 0.0.40
codegen_flags: <defaults>
</compile_context>

<pallas_src>
import functools

import jax
import jax.numpy as jnp
from jax.experimental import pallas as pl
from jax.experimental.pallas import tpu as pltpu


def _mlp_kernel(xT_ref, w1_ref, b1_ref, w2_ref, b2_ref, w3_ref, b3_ref, o_ref):
    """All activations are [features, block_b] (batch on the lane axis)."""
    xT = xT_ref[...]  # (in, blk), bf16 (or f32 if use_bf16=False)

    # fc1 + leaky_relu(0.1): (hid, in) @ (in, blk) -> (hid, blk), f32 accumulate
    h = jnp.dot(w1_ref[...], xT, preferred_element_type=jnp.float32) + b1_ref[...]
    h = jnp.maximum(h, 0.1 * h)

    # fc2 + leaky_relu(0.1)
    h = jnp.dot(w2_ref[...], h.astype(w2_ref.dtype),
                preferred_element_type=jnp.float32) + b2_ref[...]
    h = jnp.maximum(h, 0.1 * h)

    # fc3 + sigmoid: (out, hid) @ (hid, blk) -> (out, blk)  (lane-dense output)
    z = jnp.dot(w3_ref[...], h.astype(w3_ref.dtype),
                preferred_element_type=jnp.float32) + b3_ref[...]
    o_ref[...] = jax.nn.sigmoid(z).astype(o_ref.dtype)


@functools.partial(jax.jit, static_argnames=("block_b", "use_bf16"))
def discriminator_forward(x, w1, b1, w2, b2, w3, b3, *, block_b=512, use_bf16=True):
    """Forward pass of Discriminator_1.

    x : [B, input_size]
    w1: [hidden, input_size]   b1: [hidden]        (PyTorch nn.Linear layout)
    w2: [hidden, hidden]       b2: [hidden]
    w3: [output, hidden]       b3: [output]
    returns: [B, output]
    """
    B, in_sz = x.shape
    hid = w1.shape[0]
    out_sz = w3.shape[0]

    mxu_dtype = jnp.bfloat16 if use_bf16 else jnp.float32

    # ---- batch tiling: lane-dense blocks, multiple of 128, no divisibility req.
    blk = min(int(block_b), 128 * pl.cdiv(B, 128))
    blk = max(128, (blk // 128) * 128)
    n_blocks = pl.cdiv(B, blk)
    B_pad = blk * n_blocks

    # Feature-major activations: batch on the lane axis.
    xT = x.T.astype(mxu_dtype)                       # (in, B)
    if B_pad != B:
        xT = jnp.pad(xT, ((0, 0), (0, B_pad - B)))   # zero-pad extra batch cols

    w1m = w1.astype(mxu_dtype)                       # (hid, in)
    w2m = w2.astype(mxu_dtype)                       # (hid, hid)
    w3m = w3.astype(mxu_dtype)                       # (out, hid)
    b1c = b1.reshape(hid, 1).astype(jnp.float32)
    b2c = b2.reshape(hid, 1).astype(jnp.float32)
    b3c = b3.reshape(out_sz, 1).astype(jnp.float32)

    # ---- cost estimate (scheduler hint)
    flops = 2 * B_pad * (in_sz * hid + hid * hid + hid * out_sz)
    param_bytes = sum(int(a.size) * a.dtype.itemsize
                      for a in (w1m, b1c, w2m, b2c, w3m, b3c))
    bytes_accessed = (int(xT.size) * xT.dtype.itemsize
                      + B_pad * out_sz * 4
                      + param_bytes)
    cost = pl.CostEstimate(flops=flops,
                           transcendentals=B_pad * out_sz,
                           bytes_accessed=bytes_accessed)

    full = lambda shape: pl.BlockSpec(shape, lambda i: (0, 0))

    out = pl.pallas_call(
        _mlp_kernel,
        out_shape=jax.ShapeDtypeStruct((out_sz, B_pad), jnp.float32),
        grid_spec=pltpu.PrefetchScalarGridSpec(
            num_scalar_prefetch=0,
            grid=(n_blocks,),
            in_specs=[
                pl.BlockSpec((in_sz, blk), lambda i: (0, i)),   # xT tile
                full((hid, in_sz)),                             # w1
                full((hid, 1)),                                 # b1
                full((hid, hid)),                               # w2
                full((hid, 1)),                                 # b2
                full((out_sz, hid)),                            # w3
                full((out_sz, 1)),                              # b3
            ],
            out_specs=pl.BlockSpec((out_sz, blk), lambda i: (0, i)),
        ),
        compiler_params=pltpu.CompilerParams(
            dimension_semantics=("parallel",),
        ),
        cost_estimate=cost,
    )(xT, w1m, b1c, w2m, b2c, w3m, b3c)

    # (out, B_pad) -> drop batch padding -> (B, out)
    return out[:, :B].T.astype(x.dtype)


def _reference(x, w1, b1, w2, b2, w3, b3):
    h = x @ w1.T + b1
    h = jnp.where(h >= 0, h, 0.1 * h)
    h = h @ w2.T + b2
    h = jnp.where(h >= 0, h, 0.1 * h)
    return jax.nn.sigmoid(h @ w3.T + b3)


if __name__ == "__main__":
    # Shapes consistent with the module: input_size=16, hidden=32, output=1.
    input_size, hidden_size, output_size = 16, 32, 1

    key = jax.random.PRNGKey(0)
    k1, kb1, k2, kb2, k3, kb3, kx = jax.random.split(key, 7)

    # PyTorch nn.Linear layout: weight [out, in], bias [out].
    w1 = jax.random.normal(k1, (hidden_size, input_size), jnp.float32) * 0.1
    b1 = jax.random.normal(kb1, (hidden_size,), jnp.float32) * 0.1
    w2 = jax.random.normal(k2, (hidden_size, hidden_size), jnp.float32) * 0.1
    b2 = jax.random.normal(kb2, (hidden_size,), jnp.float32) * 0.1
    w3 = jax.random.normal(k3, (output_size, hidden_size), jnp.float32) * 0.1
    b3 = jax.random.normal(kb3, (output_size,), jnp.float32) * 0.1

    # Tiny (module-natural) batch and a larger batch that exercises a
    # multi-step "parallel" grid (block_b=512 -> 4 grid steps at B=2048).
    for B in (8, 2048):
        x = jax.random.normal(kx, (B, input_size), dtype=jnp.float32)

        out = discriminator_forward(x, w1, b1, w2, b2, w3, b3,
                                    block_b=512, use_bf16=True)
        out = jax.block_until_ready(out)

        ref = _reference(x, w1, b1, w2, b2, w3, b3)
        assert out.shape == (B, output_size), out.shape
        max_err = float(jnp.max(jnp.abs(out - ref)))
        # bf16 MXU operands with f32 accumulation vs. a pure-f32 reference:
        # sigmoid outputs agree to well under 1e-2.
        assert max_err < 2e-2, "mismatch vs reference: max abs err = %g" % max_err

    print("KERNEL_OK")
</pallas_src>

<mosaic_0001>
module attributes {stable_mosaic.version = 11 : i64} {
  func.func @_mlp_kernel(%arg0: i32, %arg1: memref<16x128xbf16, #tpu.memory_space<vmem>>, %arg2: memref<32x16xbf16, #tpu.memory_space<vmem>>, %arg3: memref<32x1xf32, #tpu.memory_space<vmem>>, %arg4: memref<32x32xbf16, #tpu.memory_space<vmem>>, %arg5: memref<32x1xf32, #tpu.memory_space<vmem>>, %arg6: memref<1x32xbf16, #tpu.memory_space<vmem>>, %arg7: memref<1x1xf32, #tpu.memory_space<vmem>>, %arg8: memref<1x128xf32, #tpu.memory_space<vmem>>) attributes {dimension_semantics = [#tpu.dimension_semantics<parallel>], iteration_bounds = array<i64: 1>, scalar_prefetch = 0 : i64, scratch_operands = 0 : i64, tpu.core_type = #tpu.core_type<tc>, window_params = [{transform_indices = @transform_0, window_bounds = array<i64: 16, 128>}, {pipeline_mode = #tpu.pipeline_mode<synchronous>, transform_indices = @transform_1, window_bounds = array<i64: 32, 16>}, {pipeline_mode = #tpu.pipeline_mode<synchronous>, transform_indices = @transform_2, window_bounds = array<i64: 32, 1>}, {pipeline_mode = #tpu.pipeline_mode<synchronous>, transform_indices = @transform_3, window_bounds = array<i64: 32, 32>}, {pipeline_mode = #tpu.pipeline_mode<synchronous>, transform_indices = @transform_4, window_bounds = array<i64: 32, 1>}, {pipeline_mode = #tpu.pipeline_mode<synchronous>, transform_indices = @transform_5, window_bounds = array<i64: 1, 32>}, {pipeline_mode = #tpu.pipeline_mode<synchronous>, transform_indices = @transform_6, window_bounds = array<i64: 1, 1>}, {transform_indices = @transform_7, window_bounds = array<i64: 1, 128>}]} {
    %c0 = arith.constant 0 : index
    %c0_0 = arith.constant 0 : index
    %0 = vector.load %arg1[%c0, %c0_0] : memref<16x128xbf16, #tpu.memory_space<vmem>>, vector<16x128xbf16>
    %c0_1 = arith.constant 0 : index
    %c0_2 = arith.constant 0 : index
    %1 = vector.load %arg2[%c0_1, %c0_2] : memref<32x16xbf16, #tpu.memory_space<vmem>>, vector<32x16xbf16>
    %cst = arith.constant dense<0.000000e+00> : vector<32x128xf32>
    %2 = tpu.matmul %1, %0, %cst {dimension_numbers = #tpu.dot_dimension_numbers<[1], [0], [0], [1], [0, 0, 1, 1], [], []>} : vector<32x16xbf16>, vector<16x128xbf16>, vector<32x128xf32> -> vector<32x128xf32>
    %c0_3 = arith.constant 0 : index
    %c0_4 = arith.constant 0 : index
    %3 = vector.load %arg3[%c0_3, %c0_4] : memref<32x1xf32, #tpu.memory_space<vmem>>, vector<32x1xf32>
    %4 = vector.broadcast %3 : vector<32x1xf32> to vector<32x128xf32>
    %5 = arith.addf %2, %4 : vector<32x128xf32>
    %cst_5 = arith.constant 1.000000e-01 : f32
    %6 = vector.broadcast %cst_5 : f32 to vector<32x128xf32>
    %7 = arith.mulf %6, %5 : vector<32x128xf32>
    %8 = arith.maximumf %5, %7 : vector<32x128xf32>
    %c0_6 = arith.constant 0 : index
    %c0_7 = arith.constant 0 : index
    %9 = vector.load %arg4[%c0_6, %c0_7] : memref<32x32xbf16, #tpu.memory_space<vmem>>, vector<32x32xbf16>
    %10 = arith.truncf %8 : vector<32x128xf32> to vector<32x128xbf16>
    %cst_8 = arith.constant dense<0.000000e+00> : vector<32x128xf32>
    %11 = tpu.matmul %9, %10, %cst_8 {dimension_numbers = #tpu.dot_dimension_numbers<[1], [0], [0], [1], [0, 0, 1, 1], [], []>} : vector<32x32xbf16>, vector<32x128xbf16>, vector<32x128xf32> -> vector<32x128xf32>
    %c0_9 = arith.constant 0 : index
    %c0_10 = arith.constant 0 : index
    %12 = vector.load %arg5[%c0_9, %c0_10] : memref<32x1xf32, #tpu.memory_space<vmem>>, vector<32x1xf32>
    %13 = vector.broadcast %12 : vector<32x1xf32> to vector<32x128xf32>
    %14 = arith.addf %11, %13 : vector<32x128xf32>
    %cst_11 = arith.constant 1.000000e-01 : f32
    %15 = vector.broadcast %cst_11 : f32 to vector<32x128xf32>
    %16 = arith.mulf %15, %14 : vector<32x128xf32>
    %17 = arith.maximumf %14, %16 : vector<32x128xf32>
    %c0_12 = arith.constant 0 : index
    %c0_13 = arith.constant 0 : index
    %18 = vector.load %arg6[%c0_12, %c0_13] : memref<1x32xbf16, #tpu.memory_space<vmem>>, vector<1x32xbf16>
    %19 = arith.truncf %17 : vector<32x128xf32> to vector<32x128xbf16>
    %cst_14 = arith.constant dense<0.000000e+00> : vector<1x128xf32>
    %20 = tpu.matmul %18, %19, %cst_14 {dimension_numbers = #tpu.dot_dimension_numbers<[1], [0], [0], [1], [0, 0, 1, 1], [], []>} : vector<1x32xbf16>, vector<32x128xbf16>, vector<1x128xf32> -> vector<1x128xf32>
    %c0_15 = arith.constant 0 : index
    %c0_16 = arith.constant 0 : index
    %21 = vector.load %arg7[%c0_15, %c0_16] : memref<1x1xf32, #tpu.memory_space<vmem>>, vector<1x1xf32>
    %22 = vector.broadcast %21 : vector<1x1xf32> to vector<1x128xf32>
    %23 = arith.addf %20, %22 : vector<1x128xf32>
    %24 = arith.negf %23 : vector<1x128xf32>
    %25 = math.exp %24 : vector<1x128xf32>
    %cst_17 = arith.constant 1.000000e+00 : f32
    %26 = vector.broadcast %cst_17 : f32 to vector<1x128xf32>
    %27 = arith.addf %26, %25 : vector<1x128xf32>
    %28 = arith.divf %26, %27 : vector<1x128xf32>
    %c0_18 = arith.constant 0 : index
    %c0_19 = arith.constant 0 : index
    %29 = vector.load %arg8[%c0_18, %c0_19] : memref<1x128xf32, #tpu.memory_space<vmem>>, vector<1x128xf32>
    tpu.vector_store %arg8[%c0_18, %c0_19], %28 {strides = array<i32>} : memref<1x128xf32, #tpu.memory_space<vmem>>, vector<1x128xf32>,
    return
  }
  func.func @transform_0(%arg0: i32) -> (i32, i32) {
    %c0_i32 = arith.constant 0 : i32
    %c0_i32_0 = arith.constant 0 : i32
    return %c0_i32, %arg0 : i32, i32
  }
  func.func @transform_1(%arg0: i32) -> (i32, i32) {
    %c0_i32 = arith.constant 0 : i32
    %c0_i32_0 = arith.constant 0 : i32
    %c0_i32_1 = arith.constant 0 : i32
    return %c0_i32, %c0_i32_0 : i32, i32
  }
  func.func @transform_2(%arg0: i32) -> (i32, i32) {
    %c0_i32 = arith.constant 0 : i32
    %c0_i32_0 = arith.constant 0 : i32
    %c0_i32_1 = arith.constant 0 : i32
    return %c0_i32, %c0_i32_0 : i32, i32
  }
  func.func @transform_3(%arg0: i32) -> (i32, i32) {
    %c0_i32 = arith.constant 0 : i32
    %c0_i32_0 = arith.constant 0 : i32
    %c0_i32_1 = arith.constant 0 : i32
    return %c0_i32, %c0_i32_0 : i32, i32
  }
  func.func @transform_4(%arg0: i32) -> (i32, i32) {
    %c0_i32 = arith.constant 0 : i32
    %c0_i32_0 = arith.constant 0 : i32
    %c0_i32_1 = arith.constant 0 : i32
    return %c0_i32, %c0_i32_0 : i32, i32
  }
  func.func @transform_5(%arg0: i32) -> (i32, i32) {
    %c0_i32 = arith.constant 0 : i32
    %c0_i32_0 = arith.constant 0 : i32
    %c0_i32_1 = arith.constant 0 : i32
    return %c0_i32, %c0_i32_0 : i32, i32
  }
  func.func @transform_6(%arg0: i32) -> (i32, i32) {
    %c0_i32 = arith.constant 0 : i32
    %c0_i32_0 = arith.constant 0 : i32
    %c0_i32_1 = arith.constant 0 : i32
    return %c0_i32, %c0_i32_0 : i32, i32
  }
  func.func @transform_7(%arg0: i32) -> (i32, i32) {
    %c0_i32 = arith.constant 0 : i32
    %c0_i32_0 = arith.constant 0 : i32
    return %c0_i32, %arg0 : i32, i32
  }
}

</mosaic_0001>

<llo_original>
// kernel: discriminator_forward.1
$region0: #{discriminator_forward.1}
  #allocation0 [shape = 'u32[]', space=smem, size = 0x4, offset = 0x4, fixed_abs, tag = 'smem constant byte address 0x4 - core index']
  #allocation1 [shape = 'u32[144,128]{1,0:T(1,128)}', space=vmem, size = 0x12000, scoped, tag = 'internal scratch']
  #allocation2 [shape = 'f32[1,1]{1,0:T(1,128)S(1)}', space=vmem, size = 0x200, scoped, tag = 'scoped memory for discriminator_forward.1']
  %s0 = inlined_call_operand.vmem [shape: bf16[16,128], index: 0, kind: input, shape index: {}]
  %s1 = inlined_call_operand.vmem [shape: bf16[32,16], index: 1, kind: input, shape index: {}]
  %s2 = inlined_call_operand.vmem [shape: f32[32,1], index: 2, kind: input, shape index: {}]
  %s3 = inlined_call_operand.vmem [shape: bf16[32,32], index: 3, kind: input, shape index: {}]
  %s4 = inlined_call_operand.vmem [shape: f32[32,1], index: 4, kind: input, shape index: {}]
  %s5 = inlined_call_operand.vmem [shape: bf16[1,32], index: 5, kind: input, shape index: {}]
  %s6 = inlined_call_operand.<no memory space> [shape: f32[1,1], index: 6, kind: input, shape index: {}]
  %s7 = inlined_call_operand.vmem [shape: f32[1,128], index: 7, kind: output, shape index: {}]
  %s8 = sld [smem:[#allocation0]]
  $region38: #{discriminator_forward.1} parent=0
    _
  %s10 = ssub.s32 1, %s8
  %s11 = scalar_select 0, %s10, %s8
  %v12 = vstv %s6
  %13 = vst [vmem:[#allocation2] sm:$0x1] %v12
  // Predicated region
  $region2: #{discriminator_forward.1} parent=0 // pred_check
    _
  $region3: #{discriminator_forward.1} parent=0 // pred_check_branch
    %15 = sbr.rel (0) target = $region5
  $region4: #{discriminator_forward.1} parent=0 // pred_region
    _
  $region5: #{discriminator_forward.1} parent=0 // pred_fallthru
    _
  // Predicated region
  $region6: #{discriminator_forward.1} parent=0 // pred_check
    _
  $region7: #{discriminator_forward.1} parent=0 // pred_check_branch
    %17 = sbr.rel (0) target = $region9
  $region8: #{discriminator_forward.1} parent=0 // pred_region
    _
  $region9: #{discriminator_forward.1} parent=0 // pred_fallthru
    _
  // Predicated region
  $region10: #{discriminator_forward.1} parent=0 // pred_check
    _
  $region11: #{discriminator_forward.1} parent=0 // pred_check_branch
    %19 = sbr.rel (0) target = $region13
  $region12: #{discriminator_forward.1} parent=0 // pred_region
    _
  $region13: #{discriminator_forward.1} parent=0 // pred_fallthru
    _
  // Predicated region
  $region14: #{discriminator_forward.1} parent=0 // pred_check
    _
  $region15: #{discriminator_forward.1} parent=0 // pred_check_branch
    %21 = sbr.rel (0) target = $region17
  $region16: #{discriminator_forward.1} parent=0 // pred_region
    _
  $region17: #{discriminator_forward.1} parent=0 // pred_fallthru
    _
  // Predicated region
  $region18: #{discriminator_forward.1} parent=0 // pred_check
    _
  $region19: #{discriminator_forward.1} parent=0 // pred_check_branch
    %23 = sbr.rel (0) target = $region21
  $region20: #{discriminator_forward.1} parent=0 // pred_region
    _
  $region21: #{discriminator_forward.1} parent=0 // pred_fallthru
    _
  // Predicated region
  $region22: #{discriminator_forward.1} parent=0 // pred_check
    _
  $region23: #{discriminator_forward.1} parent=0 // pred_check_branch
    %25 = sbr.rel (0) target = $region25
  $region24: #{discriminator_forward.1} parent=0 // pred_region
    _
  $region25: #{discriminator_forward.1} parent=0 // pred_fallthru
    _
  // Predicated region
  $region26: #{discriminator_forward.1} parent=0 // pred_check
    _
  $region27: #{discriminator_forward.1} parent=0 // pred_check_branch
    %27 = sbr.rel (0) target = $region29
  $region28: #{discriminator_forward.1} parent=0 // pred_region
    _
  $region29: #{discriminator_forward.1} parent=0 // pred_fallthru
    _
  %v29 = vld [vmem:[%s0] sm:$0xf]
  %v30 = vld [vmem:[%s0 + $0x4] sm:$0xf]
  %v31 = vld [vmem:[%s1] sm:$0xf]
  %v32 = vld [vmem:[%s1 + $0x4] sm:$0xf]
  %v33 = vld [vmem:[%s1 + $0x8] sm:$0xf]
  %v34 = vld [vmem:[%s1 + $0xc] sm:$0xf]
  %v35 = vld [vmem:[%s2] sm:$0xff]
  %v36 = vld [vmem:[%s2 + $0x8] sm:$0xff]
  %v37 = vld [vmem:[%s2 + $0x10] sm:$0xff]
  %v38 = vld [vmem:[%s2 + $0x18] sm:$0xff]
  %40 = vset.pattern.permute.xlu0 0
  %41 = vperm.xlu0 %40, %v35
  %v42 = vpop.permute.xlu0 %41
  %45 = vset.pattern.permute.xlu0 0
  %46 = vperm.xlu0 %45, %v36
  %v47 = vpop.permute.xlu0 %46
  %50 = vset.pattern.permute.xlu0 0
  %51 = vperm.xlu0 %50, %v37
  %v52 = vpop.permute.xlu0 %51
  %55 = vset.pattern.permute.xlu0 0
  %56 = vperm.xlu0 %55, %v38
  %v57 = vpop.permute.xlu0 %56
  %v63 = vunpack.c.l.b16 %v31
  %v64 = vunpack.c.l.b16 %v32
  %v65 = vunpack.c.l.b16 %v33
  %v66 = vunpack.c.l.b16 %v34
  %v67 = vpack.c.b16 %v64, %v63
  %v68 = vpack.c.b16 %v66, %v65
  %v71 = vunpack.c.l.b16 %v29
  %v72 = vunpack.c.l.b16 %v30
  %v73 = vpack.c.b16 %v72, %v71
  %vm75 = vcmask 130048
  %v77 = vsel %vm75, %v67, 0
  %v80 = vsel %vm75, %v68, 0
  %82 = vmatprep.subr.bf16.mxu0 0
  %83 = vmatpush1.bf16.msra.mxu0 %v73
  %84 = vmatprep.subr.bf16.mxu0 0
  %85 = vmatpush1.bf16.msra.mxu0 0
  %86 = vmatprep.subr.bf16.mxu0 0
  %87 = vmatpush1.bf16.msra.mxu0 0
  %88 = vmatprep.subr.bf16.mxu0 0
  %89 = vmatpush1.bf16.msra.mxu0 0
  %90 = vmatprep.subr.bf16.mxu0 0
  %91 = vmatpush1.bf16.msra.mxu0 0
  %92 = vmatprep.subr.bf16.mxu0 0
  %93 = vmatpush1.bf16.msra.mxu0 0
  %94 = vmatprep.subr.bf16.mxu0 0
  %95 = vmatpush1.bf16.msra.mxu0 0
  %96 = vmatprep.subr.bf16.mxu0 0
  %97 = vmatpush1.bf16.msra.mxu0 0
  %98 = vmatprep.subr.bf16.mxu0 0
  %99 = vmatpush1.bf16.msra.mxu0 0
  %100 = vmatprep.subr.bf16.mxu0 0
  %101 = vmatpush1.bf16.msra.mxu0 0
  %102 = vmatprep.subr.bf16.mxu0 0
  %103 = vmatpush1.bf16.msra.mxu0 0
  %104 = vmatprep.subr.bf16.mxu0 0
  %105 = vmatpush1.bf16.msra.mxu0 0
  %106 = vmatprep.subr.bf16.mxu0 0
  %107 = vmatpush1.bf16.msra.mxu0 0
  %108 = vmatprep.subr.bf16.mxu0 0
  %109 = vmatpush1.bf16.msra.mxu0 0
  %110 = vmatprep.subr.bf16.mxu0 0
  %111 = vmatpush1.bf16.msra.mxu0 0
  %112 = vmatprep.subr.bf16.mxu0 0
  %113 = vmatpush1.bf16.msra.mxu0 0
  %114 = vmatprep.mubr.bf16.mxu0 0
  %115 = vmatmul.mubr.bf16.gmra.mrb[0].mxu0 %v77
  %v116 = vpop.f32.mrb[0].mxu0
  %v117 = vadd.f32 %v42, %v116
  %v118 = vpop.f32.mrb[0].mxu0
  %v119 = vpop.f32.mrb[0].mxu0
  %v120 = vadd.f32 %v47, %v119
  %v121 = vpop.f32.mrb[0].mxu0
  %122 = vmatprep.mubr.bf16.mxu0 0
  %123 = vmatmul.mubr.bf16.gmra.mrb[0].mxu0 %v80
  %v124 = vpop.f32.mrb[0].mxu0
  %v125 = vadd.f32 %v52, %v124
  %v126 = vpop.f32.mrb[0].mxu0
  %v127 = vpop.f32.mrb[0].mxu0
  %v128 = vadd.f32 %v57, %v127
  %v129 = vpop.f32.mrb[0].mxu0
  %130 = vdwg.mxu0
  %v131 = vmul.f32 %v117, 0.1
  %v132 = vmul.f32 %v120, 0.1
  %v133 = vmul.f32 %v125, 0.1
  %v134 = vmul.f32 %v128, 0.1
  %v135 = vmax.f32 %v117, %v131
  %v136 = vmax.f32 %v120, %v132
  %v137 = vmax.f32 %v125, %v133
  %v138 = vmax.f32 %v128, %v134
  %v139 = vld [vmem:[%s3] sm:$0xf]
  %v140 = vld [vmem:[%s3 + $0x4] sm:$0xf]
  %v141 = vld [vmem:[%s3 + $0x8] sm:$0xf]
  %v142 = vld [vmem:[%s3 + $0xc] sm:$0xf]
  %v143 = vpack.c.bf16 %v136, %v135
  %v144 = vpack.c.bf16 %v138, %v137
  %v145 = vld [vmem:[%s4] sm:$0xff]
  %v146 = vld [vmem:[%s4 + $0x8] sm:$0xff]
  %v147 = vld [vmem:[%s4 + $0x10] sm:$0xff]
  %v148 = vld [vmem:[%s4 + $0x18] sm:$0xff]
  %150 = vset.pattern.permute.xlu0 0
  %151 = vperm.xlu0 %150, %v145
  %v152 = vpop.permute.xlu0 %151
  %155 = vset.pattern.permute.xlu0 0
  %156 = vperm.xlu0 %155, %v146
  %v157 = vpop.permute.xlu0 %156
  %160 = vset.pattern.permute.xlu0 0
  %161 = vperm.xlu0 %160, %v147
  %v162 = vpop.permute.xlu0 %161
  %165 = vset.pattern.permute.xlu0 0
  %166 = vperm.xlu0 %165, %v148
  %v167 = vpop.permute.xlu0 %166
  %v173 = vunpack.c.l.b16 %v139
  %v174 = vunpack.c.l.b16 %v140
  %v175 = vunpack.c.l.b16 %v141
  %v176 = vunpack.c.l.b16 %v142
  %v177 = vpack.c.b16 %v174, %v173
  %v178 = vpack.c.b16 %v176, %v175
  %vm179 = vcmask 261120
  %v181 = vsel %vm179, %v177, 0
  %v184 = vsel %vm179, %v178, 0
  %186 = vmatprep.subr.bf16.mxu0 0
  %187 = vmatpush1.bf16.msra.mxu0 %v143
  %188 = vmatprep.subr.bf16.mxu0 0
  %189 = vmatpush1.bf16.msra.mxu0 %v144
  %190 = vmatprep.subr.bf16.mxu0 0
  %191 = vmatpush1.bf16.msra.mxu0 0
  %192 = vmatprep.subr.bf16.mxu0 0
  %193 = vmatpush1.bf16.msra.mxu0 0
  %194 = vmatprep.subr.bf16.mxu0 0
  %195 = vmatpush1.bf16.msra.mxu0 0
  %196 = vmatprep.subr.bf16.mxu0 0
  %197 = vmatpush1.bf16.msra.mxu0 0
  %198 = vmatprep.subr.bf16.mxu0 0
  %199 = vmatpush1.bf16.msra.mxu0 0
  %200 = vmatprep.subr.bf16.mxu0 0
  %201 = vmatpush1.bf16.msra.mxu0 0
  %202 = vmatprep.subr.bf16.mxu0 0
  %203 = vmatpush1.bf16.msra.mxu0 0
  %204 = vmatprep.subr.bf16.mxu0 0
  %205 = vmatpush1.bf16.msra.mxu0 0
  %206 = vmatprep.subr.bf16.mxu0 0
  %207 = vmatpush1.bf16.msra.mxu0 0
  %208 = vmatprep.subr.bf16.mxu0 0
  %209 = vmatpush1.bf16.msra.mxu0 0
  %210 = vmatprep.subr.bf16.mxu0 0
  %211 = vmatpush1.bf16.msra.mxu0 0
  %212 = vmatprep.subr.bf16.mxu0 0
  %213 = vmatpush1.bf16.msra.mxu0 0
  %214 = vmatprep.subr.bf16.mxu0 0
  %215 = vmatpush1.bf16.msra.mxu0 0
  %216 = vmatprep.subr.bf16.mxu0 0
  %217 = vmatpush1.bf16.msra.mxu0 0
  %218 = vmatprep.mubr.bf16.mxu0 0
  %219 = vmatmul.mubr.bf16.gmra.mrb[0].mxu0 %v181
  %v220 = vpop.f32.mrb[0].mxu0
  %v221 = vadd.f32 %v152, %v220
  %v222 = vpop.f32.mrb[0].mxu0
  %v223 = vpop.f32.mrb[0].mxu0
  %v224 = vadd.f32 %v157, %v223
  %v225 = vpop.f32.mrb[0].mxu0
  %226 = vmatprep.mubr.bf16.mxu0 0
  %227 = vmatmul.mubr.bf16.gmra.mrb[0].mxu0 %v184
  %v228 = vpop.f32.mrb[0].mxu0
  %v229 = vadd.f32 %v162, %v228
  %v230 = vpop.f32.mrb[0].mxu0
  %v231 = vpop.f32.mrb[0].mxu0
  %v232 = vadd.f32 %v167, %v231
  %v233 = vpop.f32.mrb[0].mxu0
  %234 = vdwg.mxu0
  %v235 = vmul.f32 %v221, 0.1
  %v236 = vmul.f32 %v224, 0.1
  %v237 = vmul.f32 %v229, 0.1
  %v238 = vmul.f32 %v232, 0.1
  %v239 = vmax.f32 %v221, %v235
  %v240 = vmax.f32 %v224, %v236
  %v241 = vmax.f32 %v229, %v237
  %v242 = vmax.f32 %v232, %v238
  %v243 = vld [vmem:[%s5] sm:$0x1]
  %v244 = vpack.c.bf16 %v240, %v239
  %v245 = vpack.c.bf16 %v242, %v241
  %v246 = vld [vmem:[#allocation2] sm:$0x1]
  %248 = vset.pattern.permute.xlu0 0
  %249 = vperm.xlu0 %248, %v246
  %v250 = vpop.permute.xlu0 %249
  %v252 = vlaneseq
  %v253 = vshrl.u32 %v252, 7
  %v254 = vsub.s32 0, %v253
  %v255 = vrot.slane %v250, %v254
  %v257 = vsel %vm179, %v243, 0
  %259 = vmatprep.subr.bf16.mxu0 0
  %260 = vmatpush1.bf16.msra.mxu0 %v244
  %261 = vmatprep.subr.bf16.mxu0 0
  %262 = vmatpush1.bf16.msra.mxu0 %v245
  %263 = vmatprep.subr.bf16.mxu0 0
  %264 = vmatpush1.bf16.msra.mxu0 0
  %265 = vmatprep.subr.bf16.mxu0 0
  %266 = vmatpush1.bf16.msra.mxu0 0
  %267 = vmatprep.subr.bf16.mxu0 0
  %268 = vmatpush1.bf16.msra.mxu0 0
  %269 = vmatprep.subr.bf16.mxu0 0
  %270 = vmatpush1.bf16.msra.mxu0 0
  %271 = vmatprep.subr.bf16.mxu0 0
  %272 = vmatpush1.bf16.msra.mxu0 0
  %273 = vmatprep.subr.bf16.mxu0 0
  %274 = vmatpush1.bf16.msra.mxu0 0
  %275 = vmatprep.subr.bf16.mxu0 0
  %276 = vmatpush1.bf16.msra.mxu0 0
  %277 = vmatprep.subr.bf16.mxu0 0
  %278 = vmatpush1.bf16.msra.mxu0 0
  %279 = vmatprep.subr.bf16.mxu0 0
  %280 = vmatpush1.bf16.msra.mxu0 0
  %281 = vmatprep.subr.bf16.mxu0 0
  %282 = vmatpush1.bf16.msra.mxu0 0
  %283 = vmatprep.subr.bf16.mxu0 0
  %284 = vmatpush1.bf16.msra.mxu0 0
  %285 = vmatprep.subr.bf16.mxu0 0
  %286 = vmatpush1.bf16.msra.mxu0 0
  %287 = vmatprep.subr.bf16.mxu0 0
  %288 = vmatpush1.bf16.msra.mxu0 0
  %289 = vmatprep.subr.bf16.mxu0 0
  %290 = vmatpush1.bf16.msra.mxu0 0
  %291 = vmatprep.mubr.bf16.mxu0 0
  %292 = vmatmul.mubr.bf16.gmra.mrb[0].mxu0 %v257
  %v293 = vpop.f32.mrb[0].mxu0
  %v294 = vadd.f32 %v255, %v293
  %v295 = vpop.f32.mrb[0].mxu0
  %v296 = vpop.f32.mrb[0].mxu0
  %v297 = vpop.f32.mrb[0].mxu0
  %298 = vdwg.mxu0
  %v299 = vxor.u32 %v294, 2147483648
  %v300 = vmul.f32 %v299, 1.442695
  %v301 = vpow.pop %v300
  %v302 = vadd.f32 %v301, 1.0
  %v303 = vrcp.pop %v302
  %v304 = vmul.f32 1.0, %v303
  %305 = vst [vmem:[%s7] sm:$0x1] %v304
  // Predicated region
  $region30: #{discriminator_forward.1} parent=0 // pred_check
    _
  $region31: #{discriminator_forward.1} parent=0 // pred_check_branch
    %307 = sbr.rel (0) target = $region33
  $region32: #{discriminator_forward.1} parent=0 // pred_region
    _
  $region33: #{discriminator_forward.1} parent=0 // pred_fallthru
    _
  // Predicated region
  $region34: #{discriminator_forward.1} parent=0 // pred_check
    _
  $region35: #{discriminator_forward.1} parent=0 // pred_check_branch
    %309 = sbr.rel (0) target = $region37
  $region36: #{discriminator_forward.1} parent=0 // pred_region
    _
  $region37: #{discriminator_forward.1} parent=0 // pred_fallthru
    _

</llo_original>
